<compile_context>
chip_gen: v7x
topology: tpu7x:2x2x1
jax: 0.10.0
libtpu: 0.0.40
codegen_flags: <defaults>
</compile_context>

<pallas_src>
import jax
import jax.numpy as jnp
from jax import lax
from jax.experimental import pallas as pl
from jax.experimental.pallas import tpu as pltpu

D1, D2, D3 = 16, 8, 8          # conv1 / conv2 / conv3 output widths
NEG_INF = -1e30                # softmax mask sentinel (representable in bf16)
_LANE = 128


def _round_up(x, m):
    return (x + m - 1) // m * m


def _vmem_limit_bytes():
    """Generation-aware VMEM budget (v5e/v6e: 128 MiB physical, v7x: 64 MiB)."""
    try:
        cap = pltpu.get_tpu_info().vmem_capacity_bytes
    except Exception:
        cap = 64 * 1024 * 1024
    return int(cap * 3 // 4)


def _pick_tq(n_pad, vmem_bytes):
    """Largest row tile (multiple of 128, divides n_pad) whose (TQ, N) score
    slabs (bias bf16 x2 buffers + e f32 + p bf16 ~ 10 B/elem) fit the budget."""
    for tq in (512, 256, 128):
        if n_pad % tq == 0 and tq * n_pad * 10 <= vmem_bytes // 2:
            return tq
    return 128


# ----------------------------------------------------------------------------
# Pallas kernel: one GAT layer (+ optional fused Linear head) per row tile
# ----------------------------------------------------------------------------
def _make_gat_kernel(fin_aug, fout, r_vec, with_head):
    # fin_aug = Fin + 1: the wrapper appends a ones column to the node features;
    # the packed weight is block_diag(W, 1) so the transform emits [h | 1] and a
    # single aggregation matmul also yields the softmax denominator.
    dn = (((1,), (1,)), ((), ()))     # contract last dim of both operands (A @ B.T)

    def kernel(hfull_ref, hq_ref, bias_ref, p_ref, out_ref):
        P = p_ref[...]                                          # packed layer params (f32)
        w_aug = P[0:fin_aug, 0:fout + 1]                        # block_diag(W, 1)
        a_src = P[r_vec + 0:r_vec + 1, 0:fin_aug]               # attention vecs folded into W
        a_dst = P[r_vec + 1:r_vec + 2, 0:fin_aug]
        b     = P[r_vec + 2:r_vec + 3, 0:fout]

        hfull = hfull_ref[...]                                  # (N, Fin+1) f32, all sources
        hq    = hq_ref[...]                                     # (TQ, Fin+1) f32, tile targets
        bias  = bias_ref[...]                                   # (TQ, N) bf16 additive mask

        # Node transform in bf16 (h is consumed only by the bf16 aggregation).
        h_aug = jnp.dot(hfull.astype(jnp.bfloat16), w_aug.astype(jnp.bfloat16),
                        preferred_element_type=jnp.float32
                        ).astype(jnp.bfloat16)                  # (N, Fout+1) = [h | 1]

        # Scores via folded vectors: src lane-major (1, N), dst sublane-major
        # (TQ, 1) -> no transposes, no XLU cross-lane reductions.
        s_src = lax.dot_general(a_src, hfull, dn,
                                preferred_element_type=jnp.float32)      # (1, N)
        s_dst = lax.dot_general(hq, a_dst, dn,
                                preferred_element_type=jnp.float32)      # (TQ, 1)
        e = s_dst + s_src                                                # (TQ, N)
        e = jnp.where(e > 0.0, e, 0.2 * e)                               # LeakyReLU(0.2)
        # f32 chain (v5e-safe); bf16 bias upcast at use.  Mask + duplicate-edge
        # log-count live in `bias`; masked entries underflow to 0 after exp.
        e = e + bias.astype(jnp.float32)
        m = jnp.max(e, axis=-1, keepdims=True)
        p = jnp.exp(e - m).astype(jnp.bfloat16)                          # (TQ, N) bf16, fused

        # One MXU matmul gives the aggregate AND the row sum (ones column).
        agg = jnp.dot(p, h_aug, preferred_element_type=jnp.float32)      # (TQ, Fout+1)
        denom = agg[:, fout:fout + 1]                                    # self loop => > 0
        out = jnp.maximum(agg[:, 0:fout] * pl.reciprocal(denom) + b, 0.0)   # +bias, ReLU

        if with_head:
            wfc = P[r_vec + 3:r_vec + 4, 0:fout]
            bfc = P[r_vec + 4:r_vec + 5, 0:1]
            # fc head fused, emitted lane-dense as (1, TQ)
            out_ref[...] = lax.dot_general(wfc, out, dn,
                                           preferred_element_type=jnp.float32) + bfc
        else:
            out_ref[...] = out

    return kernel


# ----------------------------------------------------------------------------
# Wrapper
# ----------------------------------------------------------------------------
def _pack_layer(w, a_src, a_dst, b, wfc=None, bfc=None):
    """Pack one layer's params into a single padded f32 buffer, folding the
    attention vectors into the weight and augmenting W to block_diag(W, 1)."""
    fin, fout = w.shape
    fin_aug = fin + 1
    r_vec = _round_up(fin_aug, 8)
    n_vec = 5 if wfc is not None else 3
    rows = r_vec + _round_up(n_vec, 8)
    cols = max(fin_aug, fout + 1)
    P = jnp.zeros((rows, cols), jnp.float32)
    P = P.at[0:fin, 0:fout].set(w)
    P = P.at[fin, fout].set(1.0)                         # ones column pass-through
    P = P.at[r_vec + 0, 0:fin].set((a_src @ w.T).reshape(-1))   # score = h_in . (a W^T)
    P = P.at[r_vec + 1, 0:fin].set((a_dst @ w.T).reshape(-1))
    P = P.at[r_vec + 2, 0:fout].set(b.reshape(-1))
    if wfc is not None:
        P = P.at[r_vec + 3, 0:fout].set(wfc.reshape(-1))
        P = P.at[r_vec + 4, 0:1].set(bfc.reshape(-1))
    return P, fin_aug, fout, r_vec


def build_softmax_bias(edge_index, n_pad):
    """Dense additive softmax mask in bf16: log(edge multiplicity) for src->dst,
    exactly one self loop per node (PyG removes then re-adds self loops),
    -1e30 elsewhere.  Padded nodes only get their own self loop."""
    src = edge_index[:, 0]
    dst = edge_index[:, 1]
    cnt = jnp.zeros((n_pad, n_pad), jnp.float32).at[dst, src].add(1.0)
    eye = jnp.eye(n_pad, dtype=jnp.float32)
    cnt = cnt * (1.0 - eye) + eye
    bias = jnp.where(cnt > 0, jnp.log(jnp.maximum(cnt, 1.0)), jnp.float32(NEG_INF))
    return bias.astype(jnp.bfloat16)       # halves the only O(N^2) DMA / VMEM resident


def _gat_layer_call(h_aug, bias, P, fin_aug, fout, r_vec, tq, vmem_bytes, with_head):
    n_pad = h_aug.shape[0]
    kernel = _make_gat_kernel(fin_aug, fout, r_vec, with_head)
    if with_head:
        out_shape = jax.ShapeDtypeStruct((1, n_pad), jnp.float32)
        out_spec = pl.BlockSpec((1, tq), lambda i: (0, i))       # lane-dense slab
    else:
        out_shape = jax.ShapeDtypeStruct((n_pad, fout), jnp.float32)
        out_spec = pl.BlockSpec((tq, fout), lambda i: (i, 0))
    return pl.pallas_call(
        kernel,
        out_shape=out_shape,
        grid=(n_pad // tq,),
        in_specs=[
            pl.BlockSpec((n_pad, fin_aug), lambda i: (0, 0)),    # all source nodes
            pl.BlockSpec((tq, fin_aug), lambda i: (i, 0)),       # this tile's target rows
            pl.BlockSpec((tq, n_pad), lambda i: (i, 0)),         # bf16 bias row tile
            pl.BlockSpec(P.shape, lambda i: (0, 0)),             # packed params (1 DMA)
        ],
        out_specs=out_spec,
        compiler_params=pltpu.CompilerParams(
            dimension_semantics=("parallel",),                   # independent row tiles
            vmem_limit_bytes=vmem_bytes,
        ),
    )(h_aug, h_aug, bias, P)


def gnn_forward(x, edge_index, params, target_node_idx=None):
    """x: (N, F0) f32 node features; edge_index: (E, 2) int32 rows of [src, dst]."""
    N, _ = x.shape
    if target_node_idx is not None:
        x = x.at[target_node_idx].set(0.0)

    vmem_bytes = _vmem_limit_bytes()
    n_pad = _round_up(N, _LANE)
    tq = _pick_tq(n_pad, vmem_bytes)
    x = jnp.pad(x, ((0, n_pad - N), (0, 0)))

    bias = build_softmax_bias(edge_index, n_pad)

    P1 = _pack_layer(params["w1"], params["as1"], params["ad1"], params["b1"])
    P2 = _pack_layer(params["w2"], params["as2"], params["ad2"], params["b2"])
    P3 = _pack_layer(params["w3"], params["as3"], params["ad3"], params["b3"],
                     wfc=params["wfc"], bfc=params["bfc"])

    def aug(h):   # ones column -> transform emits [h | 1]; MXU row-sum trick
        return jnp.concatenate([h, jnp.ones((h.shape[0], 1), h.dtype)], axis=1)

    # dropout(p=0.05) after conv1 / conv3 is identity in eval mode.
    h = _gat_layer_call(aug(x), bias, *P1, tq=tq, vmem_bytes=vmem_bytes,
                        with_head=False)                       # conv1 + ReLU
    h = _gat_layer_call(aug(h), bias, *P2, tq=tq, vmem_bytes=vmem_bytes,
                        with_head=False)                       # conv2 + ReLU
    row = _gat_layer_call(aug(h), bias, *P3, tq=tq, vmem_bytes=vmem_bytes,
                          with_head=True)                      # conv3 + ReLU + fc
    return row[0, :N].reshape(N, 1)


def init_params(key, num_node_features):
    dims = [(num_node_features, D1), (D1, D2), (D2, D3)]   # conv1, conv2, conv3
    params = {}
    keys = jax.random.split(key, 16)
    ki = 0
    for li, (fin, fout) in enumerate(dims, start=1):
        scale = 1.0 / jnp.sqrt(jnp.float32(fin))
        params[f"w{li}"] = jax.random.normal(keys[ki], (fin, fout), jnp.float32) * scale; ki += 1
        params[f"as{li}"] = jax.random.normal(keys[ki], (1, fout), jnp.float32) * 0.1;    ki += 1
        params[f"ad{li}"] = jax.random.normal(keys[ki], (1, fout), jnp.float32) * 0.1;    ki += 1
        params[f"b{li}"] = jnp.zeros((1, fout), jnp.float32)
    params["wfc"] = jax.random.normal(keys[ki], (D3, 1), jnp.float32) * (1.0 / jnp.sqrt(8.0)); ki += 1
    params["bfc"] = jnp.zeros((1, 1), jnp.float32)
    return params


if __name__ == "__main__":
    key = jax.random.PRNGKey(0)
    k_x, k_e, k_p = jax.random.split(key, 3)

    N = 128                     # number of nodes (lane-aligned)
    F0 = 8                      # num_node_features
    E = 512                     # number of directed edges

    x = jax.random.normal(k_x, (N, F0), jnp.float32)
    edge_index = jax.random.randint(k_e, (E, 2), 0, N, jnp.int32)   # rows = [src, dst]
    params = init_params(k_p, F0)

    out = gnn_forward(x, edge_index, params, target_node_idx=3)
    jax.block_until_ready(out)
    assert out.shape == (N, 1) and out.dtype == jnp.float32
    assert bool(jnp.all(jnp.isfinite(out)))
    print("KERNEL_OK")
</pallas_src>

<mosaic_0001>
module attributes {stable_mosaic.version = 11 : i64} {
  func.func @kernel(%arg0: i32, %arg1: memref<128x9xf32, #tpu.memory_space<vmem>>, %arg2: memref<128x9xf32, #tpu.memory_space<vmem>>, %arg3: memref<128x128xbf16, #tpu.memory_space<vmem>>, %arg4: memref<24x17xf32, #tpu.memory_space<vmem>>, %arg5: memref<128x16xf32, #tpu.memory_space<vmem>>) attributes {dimension_semantics = [#tpu.dimension_semantics<parallel>], iteration_bounds = array<i64: 1>, scalar_prefetch = 0 : i64, scratch_operands = 0 : i64, tpu.core_type = #tpu.core_type<tc>, window_params = [{pipeline_mode = #tpu.pipeline_mode<synchronous>, transform_indices = @transform_0, window_bounds = array<i64: 128, 9>}, {transform_indices = @transform_1, window_bounds = array<i64: 128, 9>}, {transform_indices = @transform_2, window_bounds = array<i64: 128, 128>}, {pipeline_mode = #tpu.pipeline_mode<synchronous>, transform_indices = @transform_3, window_bounds = array<i64: 24, 17>}, {transform_indices = @transform_4, window_bounds = array<i64: 128, 16>}]} {
    %c0 = arith.constant 0 : index
    %c0_0 = arith.constant 0 : index
    %0 = vector.load %arg4[%c0, %c0_0] : memref<24x17xf32, #tpu.memory_space<vmem>>, vector<24x17xf32>
    %1 = vector.extract_strided_slice %0 {offsets = [0, 0], sizes = [9, 17], strides = [1, 1]} : vector<24x17xf32> to vector<9x17xf32>
    %2 = vector.extract_strided_slice %0 {offsets = [16, 0], sizes = [1, 9], strides = [1, 1]} : vector<24x17xf32> to vector<1x9xf32>
    %3 = vector.extract_strided_slice %0 {offsets = [17, 0], sizes = [1, 9], strides = [1, 1]} : vector<24x17xf32> to vector<1x9xf32>
    %4 = vector.extract_strided_slice %0 {offsets = [18, 0], sizes = [1, 16], strides = [1, 1]} : vector<24x17xf32> to vector<1x16xf32>
    %c0_1 = arith.constant 0 : index
    %c0_2 = arith.constant 0 : index
    %5 = vector.load %arg1[%c0_1, %c0_2] : memref<128x9xf32, #tpu.memory_space<vmem>>, vector<128x9xf32>
    %c0_3 = arith.constant 0 : index
    %c0_4 = arith.constant 0 : index
    %6 = vector.load %arg2[%c0_3, %c0_4] : memref<128x9xf32, #tpu.memory_space<vmem>>, vector<128x9xf32>
    %c0_5 = arith.constant 0 : index
    %c0_6 = arith.constant 0 : index
    %7 = vector.load %arg3[%c0_5, %c0_6] : memref<128x128xbf16, #tpu.memory_space<vmem>>, vector<128x128xbf16>
    %8 = arith.truncf %5 : vector<128x9xf32> to vector<128x9xbf16>
    %9 = arith.truncf %1 : vector<9x17xf32> to vector<9x17xbf16>
    %cst = arith.constant dense<0.000000e+00> : vector<128x17xf32>
    %10 = tpu.matmul %8, %9, %cst {dimension_numbers = #tpu.dot_dimension_numbers<[1], [0], [0], [1], [0, 0, 1, 1], [], []>} : vector<128x9xbf16>, vector<9x17xbf16>, vector<128x17xf32> -> vector<128x17xf32>
    %11 = arith.truncf %10 : vector<128x17xf32> to vector<128x17xbf16>
    %cst_7 = arith.constant dense<0.000000e+00> : vector<1x128xf32>
    %12 = tpu.matmul %2, %5, %cst_7 {dimension_numbers = #tpu.dot_dimension_numbers<[1], [1], [0], [0], [0, 0, 1, 0], [], []>} : vector<1x9xf32>, vector<128x9xf32>, vector<1x128xf32> -> vector<1x128xf32>
    %cst_8 = arith.constant dense<0.000000e+00> : vector<128x1xf32>
    %13 = tpu.matmul %6, %3, %cst_8 {dimension_numbers = #tpu.dot_dimension_numbers<[1], [1], [0], [0], [0, 0, 1, 0], [], []>} : vector<128x9xf32>, vector<1x9xf32>, vector<128x1xf32> -> vector<128x1xf32>
    %14 = vector.broadcast %13 : vector<128x1xf32> to vector<128x128xf32>
    %15 = vector.broadcast %12 : vector<1x128xf32> to vector<128x128xf32>
    %16 = arith.addf %14, %15 : vector<128x128xf32>
    %cst_9 = arith.constant 0.000000e+00 : f32
    %17 = vector.broadcast %cst_9 : f32 to vector<128x128xf32>
    %18 = arith.cmpf ogt, %16, %17 : vector<128x128xf32>
    %cst_10 = arith.constant 2.000000e-01 : f32
    %19 = vector.broadcast %cst_10 : f32 to vector<128x128xf32>
    %20 = arith.mulf %19, %16 : vector<128x128xf32>
    %21 = arith.select %18, %16, %20 : vector<128x128xi1>, vector<128x128xf32>
    %22 = arith.extf %7 : vector<128x128xbf16> to vector<128x128xf32>
    %23 = arith.addf %21, %22 : vector<128x128xf32>
    %cst_11 = arith.constant dense<0xFF800000> : vector<128xf32>
    %24 = vector.multi_reduction <maximumf>, %23, %cst_11 [1] : vector<128x128xf32> to vector<128xf32>
    %25 = vector.shape_cast %24 : vector<128xf32> to vector<128x1xf32>
    %26 = vector.broadcast %25 : vector<128x1xf32> to vector<128x128xf32>
    %27 = arith.subf %23, %26 : vector<128x128xf32>
    %28 = math.exp %27 : vector<128x128xf32>
    %29 = arith.truncf %28 : vector<128x128xf32> to vector<128x128xbf16>
    %cst_12 = arith.constant dense<0.000000e+00> : vector<128x17xf32>
    %30 = tpu.matmul %29, %11, %cst_12 {dimension_numbers = #tpu.dot_dimension_numbers<[1], [0], [0], [1], [0, 0, 1, 1], [], []>} : vector<128x128xbf16>, vector<128x17xbf16>, vector<128x17xf32> -> vector<128x17xf32>
    %31 = vector.extract_strided_slice %30 {offsets = [0, 16], sizes = [128, 1], strides = [1, 1]} : vector<128x17xf32> to vector<128x1xf32>
    %32 = vector.extract_strided_slice %30 {offsets = [0, 0], sizes = [128, 16], strides = [1, 1]} : vector<128x17xf32> to vector<128x16xf32>
    %33 = tpu.reciprocal %31 : vector<128x1xf32> -> vector<128x1xf32>
    %34 = vector.broadcast %33 : vector<128x1xf32> to vector<128x16xf32>
    %35 = arith.mulf %32, %34 : vector<128x16xf32>
    %36 = vector.broadcast %4 : vector<1x16xf32> to vector<128x16xf32>
    %37 = arith.addf %35, %36 : vector<128x16xf32>
    %cst_13 = arith.constant 0.000000e+00 : f32
    %38 = vector.broadcast %cst_13 : f32 to vector<128x16xf32>
    %39 = arith.maximumf %37, %38 : vector<128x16xf32>
    %c0_14 = arith.constant 0 : index
    %c0_15 = arith.constant 0 : index
    %40 = vector.load %arg5[%c0_14, %c0_15] : memref<128x16xf32, #tpu.memory_space<vmem>>, vector<128x16xf32>
    tpu.vector_store %arg5[%c0_14, %c0_15], %39 {strides = array<i32>} : memref<128x16xf32, #tpu.memory_space<vmem>>, vector<128x16xf32>,
    return
  }
  func.func @transform_0(%arg0: i32) -> (i32, i32) {
    %c0_i32 = arith.constant 0 : i32
    %c0_i32_0 = arith.constant 0 : i32
    %c0_i32_1 = arith.constant 0 : i32
    return %c0_i32, %c0_i32_0 : i32, i32
  }
  func.func @transform_1(%arg0: i32) -> (i32, i32) {
    %c0_i32 = arith.constant 0 : i32
    %c0_i32_0 = arith.constant 0 : i32
    return %arg0, %c0_i32 : i32, i32
  }
  func.func @transform_2(%arg0: i32) -> (i32, i32) {
    %c0_i32 = arith.constant 0 : i32
    %c0_i32_0 = arith.constant 0 : i32
    return %arg0, %c0_i32 : i32, i32
  }
  func.func @transform_3(%arg0: i32) -> (i32, i32) {
    %c0_i32 = arith.constant 0 : i32
    %c0_i32_0 = arith.constant 0 : i32
    %c0_i32_1 = arith.constant 0 : i32
    return %c0_i32, %c0_i32_0 : i32, i32
  }
  func.func @transform_4(%arg0: i32) -> (i32, i32) {
    %c0_i32 = arith.constant 0 : i32
    %c0_i32_0 = arith.constant 0 : i32
    return %arg0, %c0_i32 : i32, i32
  }
}

</mosaic_0001>

<llo_original>
// kernel: tpu_custom_call.1
$region0: #{tpu_custom_call.1}
  #allocation0 [shape = 'u32[]', space=smem, size = 0x4, offset = 0x4, fixed_abs, tag = 'smem constant byte address 0x4 - core index']
  #allocation1 [shape = 'u32[144,128]{1,0:T(1,128)}', space=vmem, size = 0x12000, scoped, tag = 'internal scratch']
  %s0 = inlined_call_operand.vmem [shape: f32[128,9], index: 0, kind: input, shape index: {}]
  %s1 = inlined_call_operand.vmem [shape: f32[128,9], index: 1, kind: input, shape index: {}]
  %s2 = inlined_call_operand.vmem [shape: bf16[128,128], index: 2, kind: input, shape index: {}]
  %s3 = inlined_call_operand.vmem [shape: f32[24,17], index: 3, kind: input, shape index: {}]
  %s4 = inlined_call_operand.vmem [shape: f32[128,16], index: 4, kind: output, shape index: {}]
  %s5 = sld [smem:[#allocation0]]
  $region26: #{tpu_custom_call.1} parent=0
    _
  %s7 = ssub.s32 1, %s5
  %s8 = scalar_select 0, %s7, %s5
  // Predicated region
  $region2: #{tpu_custom_call.1} parent=0 // pred_check
    _
  $region3: #{tpu_custom_call.1} parent=0 // pred_check_branch
    %10 = sbr.rel (0) target = $region5
  $region4: #{tpu_custom_call.1} parent=0 // pred_region
    _
  $region5: #{tpu_custom_call.1} parent=0 // pred_fallthru
    _
  // Predicated region
  $region6: #{tpu_custom_call.1} parent=0 // pred_check
    _
  $region7: #{tpu_custom_call.1} parent=0 // pred_check_branch
    %12 = sbr.rel (0) target = $region9
  $region8: #{tpu_custom_call.1} parent=0 // pred_region
    _
  $region9: #{tpu_custom_call.1} parent=0 // pred_fallthru
    _
  // Predicated region
  $region10: #{tpu_custom_call.1} parent=0 // pred_check
    _
  $region11: #{tpu_custom_call.1} parent=0 // pred_check_branch
    %14 = sbr.rel (0) target = $region13
  $region12: #{tpu_custom_call.1} parent=0 // pred_region
    _
  $region13: #{tpu_custom_call.1} parent=0 // pred_fallthru
    _
  // Predicated region
  $region14: #{tpu_custom_call.1} parent=0 // pred_check
    _
  $region15: #{tpu_custom_call.1} parent=0 // pred_check_branch
    %16 = sbr.rel (0) target = $region17
  $region16: #{tpu_custom_call.1} parent=0 // pred_region
    _
  $region17: #{tpu_custom_call.1} parent=0 // pred_fallthru
    _
  %v18 = vld [vmem:[%s3] sm:$0xff]
  %v19 = vld [vmem:[%s3 + $0x8] sm:$0xff]
  %v20 = vld [vmem:[%s3 + $0x10] sm:$0xff]
  %v21 = vld [vmem:[%s0] sm:$0xff]
  %v22 = vld [vmem:[%s0 + $0x8] sm:$0xff]
  %v23 = vld [vmem:[%s0 + $0x10] sm:$0xff]
  %v24 = vld [vmem:[%s0 + $0x18] sm:$0xff]
  %v25 = vld [vmem:[%s0 + $0x20] sm:$0xff]
  %v26 = vld [vmem:[%s0 + $0x28] sm:$0xff]
  %v27 = vld [vmem:[%s0 + $0x30] sm:$0xff]
  %v28 = vld [vmem:[%s0 + $0x38] sm:$0xff]
  %v29 = vld [vmem:[%s0 + $0x40] sm:$0xff]
  %v30 = vld [vmem:[%s0 + $0x48] sm:$0xff]
  %v31 = vld [vmem:[%s0 + $0x50] sm:$0xff]
  %v32 = vld [vmem:[%s0 + $0x58] sm:$0xff]
  %v33 = vld [vmem:[%s0 + $0x60] sm:$0xff]
  %v34 = vld [vmem:[%s0 + $0x68] sm:$0xff]
  %v35 = vld [vmem:[%s0 + $0x70] sm:$0xff]
  %v36 = vld [vmem:[%s0 + $0x78] sm:$0xff]
  %v37 = vld [vmem:[%s1] sm:$0xff]
  %v38 = vld [vmem:[%s1 + $0x8] sm:$0xff]
  %v39 = vld [vmem:[%s1 + $0x10] sm:$0xff]
  %v40 = vld [vmem:[%s1 + $0x18] sm:$0xff]
  %v41 = vld [vmem:[%s1 + $0x20] sm:$0xff]
  %v42 = vld [vmem:[%s1 + $0x28] sm:$0xff]
  %v43 = vld [vmem:[%s1 + $0x30] sm:$0xff]
  %v44 = vld [vmem:[%s1 + $0x38] sm:$0xff]
  %v45 = vld [vmem:[%s1 + $0x40] sm:$0xff]
  %v46 = vld [vmem:[%s1 + $0x48] sm:$0xff]
  %v47 = vld [vmem:[%s1 + $0x50] sm:$0xff]
  %v48 = vld [vmem:[%s1 + $0x58] sm:$0xff]
  %v49 = vld [vmem:[%s1 + $0x60] sm:$0xff]
  %v50 = vld [vmem:[%s1 + $0x68] sm:$0xff]
  %v51 = vld [vmem:[%s1 + $0x70] sm:$0xff]
  %v52 = vld [vmem:[%s1 + $0x78] sm:$0xff]
  %v53 = vld [vmem:[%s2] sm:$0xf]
  %v54 = vld [vmem:[%s2 + $0x4] sm:$0xf]
  %v55 = vld [vmem:[%s2 + $0x8] sm:$0xf]
  %v56 = vld [vmem:[%s2 + $0xc] sm:$0xf]
  %v57 = vld [vmem:[%s2 + $0x10] sm:$0xf]
  %v58 = vld [vmem:[%s2 + $0x14] sm:$0xf]
  %v59 = vld [vmem:[%s2 + $0x18] sm:$0xf]
  %v60 = vld [vmem:[%s2 + $0x1c] sm:$0xf]
  %v61 = vld [vmem:[%s2 + $0x20] sm:$0xf]
  %v62 = vld [vmem:[%s2 + $0x24] sm:$0xf]
  %v63 = vld [vmem:[%s2 + $0x28] sm:$0xf]
  %v64 = vld [vmem:[%s2 + $0x2c] sm:$0xf]
  %v65 = vld [vmem:[%s2 + $0x30] sm:$0xf]
  %v66 = vld [vmem:[%s2 + $0x34] sm:$0xf]
  %v67 = vld [vmem:[%s2 + $0x38] sm:$0xf]
  %v68 = vld [vmem:[%s2 + $0x3c] sm:$0xf]
  %v69 = vpack.c.bf16 %v22, %v21
  %v70 = vpack.c.bf16 %v24, %v23
  %v71 = vpack.c.bf16 %v26, %v25
  %v72 = vpack.c.bf16 %v28, %v27
  %v73 = vpack.c.bf16 %v30, %v29
  %v74 = vpack.c.bf16 %v32, %v31
  %v75 = vpack.c.bf16 %v34, %v33
  %v76 = vpack.c.bf16 %v36, %v35
  %v77 = vpack.c.bf16 %v19, %v18
  %vm78 = vcmask 72704
  %v80 = vsel %vm78, %v69, 0
  %v83 = vsel %vm78, %v70, 0
  %v86 = vsel %vm78, %v71, 0
  %v89 = vsel %vm78, %v72, 0
  %v92 = vsel %vm78, %v73, 0
  %v95 = vsel %vm78, %v74, 0
  %v98 = vsel %vm78, %v75, 0
  %v101 = vsel %vm78, %v76, 0
  %vm103 = vcmask 1043456
  %vm104 = vcmask 1044480
  %v105 = vsel %vm103, 4294967295, 65535
  %v106 = vsel %vm104, %v105, 0
  %v108 = vand.u32 %v77, %v106
  %110 = vmatprep.subr.bf16.mxu0 0
  %111 = vmatpush1.bf16.msra.mxu0 %v108
  %112 = vmatprep.subr.bf16.mxu0 0
  %113 = vmatpush1.bf16.msra.mxu0 0
  %114 = vmatprep.subr.bf16.mxu0 0
  %115 = vmatpush1.bf16.msra.mxu0 0
  %116 = vmatprep.subr.bf16.mxu0 0
  %117 = vmatpush1.bf16.msra.mxu0 0
  %118 = vmatprep.subr.bf16.mxu0 0
  %119 = vmatpush1.bf16.msra.mxu0 0
  %120 = vmatprep.subr.bf16.mxu0 0
  %121 = vmatpush1.bf16.msra.mxu0 0
  %122 = vmatprep.subr.bf16.mxu0 0
  %123 = vmatpush1.bf16.msra.mxu0 0
  %124 = vmatprep.subr.bf16.mxu0 0
  %125 = vmatpush1.bf16.msra.mxu0 0
  %126 = vmatprep.subr.bf16.mxu0 0
  %127 = vmatpush1.bf16.msra.mxu0 0
  %128 = vmatprep.subr.bf16.mxu0 0
  %129 = vmatpush1.bf16.msra.mxu0 0
  %130 = vmatprep.subr.bf16.mxu0 0
  %131 = vmatpush1.bf16.msra.mxu0 0
  %132 = vmatprep.subr.bf16.mxu0 0
  %133 = vmatpush1.bf16.msra.mxu0 0
  %134 = vmatprep.subr.bf16.mxu0 0
  %135 = vmatpush1.bf16.msra.mxu0 0
  %136 = vmatprep.subr.bf16.mxu0 0
  %137 = vmatpush1.bf16.msra.mxu0 0
  %138 = vmatprep.subr.bf16.mxu0 0
  %139 = vmatpush1.bf16.msra.mxu0 0
  %140 = vmatprep.subr.bf16.mxu0 0
  %141 = vmatpush1.bf16.msra.mxu0 0
  %142 = vmatprep.mubr.bf16.mxu0 0
  %143 = vmatmul.mubr.bf16.gmra.mrb[0].mxu0 %v80
  %v144 = vpop.f32.mrb[0].mxu0
  %v145 = vadd.f32 0.0, %v144
  %v146 = vpop.f32.mrb[0].mxu0
  %v147 = vpop.f32.mrb[0].mxu0
  %v148 = vadd.f32 0.0, %v147
  %v149 = vpop.f32.mrb[0].mxu0
  %150 = vmatprep.mubr.bf16.mxu0 0
  %151 = vmatmul.mubr.bf16.gmra.mrb[0].mxu0 %v83
  %v152 = vpop.f32.mrb[0].mxu0
  %v153 = vadd.f32 0.0, %v152
  %v154 = vpop.f32.mrb[0].mxu0
  %v155 = vpop.f32.mrb[0].mxu0
  %v156 = vadd.f32 0.0, %v155
  %v157 = vpop.f32.mrb[0].mxu0
  %158 = vmatprep.mubr.bf16.mxu0 0
  %159 = vmatmul.mubr.bf16.gmra.mrb[0].mxu0 %v86
  %v160 = vpop.f32.mrb[0].mxu0
  %v161 = vadd.f32 0.0, %v160
  %v162 = vpop.f32.mrb[0].mxu0
  %v163 = vpop.f32.mrb[0].mxu0
  %v164 = vadd.f32 0.0, %v163
  %v165 = vpop.f32.mrb[0].mxu0
  %166 = vmatprep.mubr.bf16.mxu0 0
  %167 = vmatmul.mubr.bf16.gmra.mrb[0].mxu0 %v89
  %v168 = vpop.f32.mrb[0].mxu0
  %v169 = vadd.f32 0.0, %v168
  %v170 = vpop.f32.mrb[0].mxu0
  %v171 = vpop.f32.mrb[0].mxu0
  %v172 = vadd.f32 0.0, %v171
  %v173 = vpop.f32.mrb[0].mxu0
  %174 = vmatprep.mubr.bf16.mxu0 0
  %175 = vmatmul.mubr.bf16.gmra.mrb[0].mxu0 %v92
  %v176 = vpop.f32.mrb[0].mxu0
  %v177 = vadd.f32 0.0, %v176
  %v178 = vpop.f32.mrb[0].mxu0
  %v179 = vpop.f32.mrb[0].mxu0
  %v180 = vadd.f32 0.0, %v179
  %v181 = vpop.f32.mrb[0].mxu0
  %182 = vmatprep.mubr.bf16.mxu0 0
  %183 = vmatmul.mubr.bf16.gmra.mrb[0].mxu0 %v95
  %v184 = vpop.f32.mrb[0].mxu0
  %v185 = vadd.f32 0.0, %v184
  %v186 = vpop.f32.mrb[0].mxu0
  %v187 = vpop.f32.mrb[0].mxu0
  %v188 = vadd.f32 0.0, %v187
  %v189 = vpop.f32.mrb[0].mxu0
  %190 = vmatprep.mubr.bf16.mxu0 0
  %191 = vmatmul.mubr.bf16.gmra.mrb[0].mxu0 %v98
  %v192 = vpop.f32.mrb[0].mxu0
  %v193 = vadd.f32 0.0, %v192
  %v194 = vpop.f32.mrb[0].mxu0
  %v195 = vpop.f32.mrb[0].mxu0
  %v196 = vadd.f32 0.0, %v195
  %v197 = vpop.f32.mrb[0].mxu0
  %198 = vmatprep.mubr.bf16.mxu0 0
  %199 = vmatmul.mubr.bf16.gmra.mrb[0].mxu0 %v101
  %v200 = vpop.f32.mrb[0].mxu0
  %v201 = vadd.f32 0.0, %v200
  %v202 = vpop.f32.mrb[0].mxu0
  %v203 = vpop.f32.mrb[0].mxu0
  %v204 = vadd.f32 0.0, %v203
  %v205 = vpop.f32.mrb[0].mxu0
  %206 = vdwg.mxu0
  %v207 = vpack.c.bf16 %v148, %v145
  %v208 = vpack.c.bf16 %v156, %v153
  %v209 = vpack.c.bf16 %v164, %v161
  %v210 = vpack.c.bf16 %v172, %v169
  %v211 = vpack.c.bf16 %v180, %v177
  %v212 = vpack.c.bf16 %v188, %v185
  %v213 = vpack.c.bf16 %v196, %v193
  %v214 = vpack.c.bf16 %v204, %v201
  %v216 = vsel %vm78, %v20, 0
  %v219 = vsel %vm78, %v21, 0
  %v222 = vsel %vm78, %v22, 0
  %v225 = vsel %vm78, %v23, 0
  %v228 = vsel %vm78, %v24, 0
  %v231 = vsel %vm78, %v25, 0
  %v234 = vsel %vm78, %v26, 0
  %v237 = vsel %vm78, %v27, 0
  %v240 = vsel %vm78, %v28, 0
  %v243 = vsel %vm78, %v29, 0
  %v246 = vsel %vm78, %v30, 0
  %v249 = vsel %vm78, %v31, 0
  %v252 = vsel %vm78, %v32, 0
  %v255 = vsel %vm78, %v33, 0
  %v258 = vsel %vm78, %v34, 0
  %v261 = vsel %vm78, %v35, 0
  %v264 = vsel %vm78, %v36, 0
  %266 = vmatprep.subr.mxu0 0.0
  %267 = vmatpush1.xpose.msra.mxu0 %v219
  %268 = vmatprep.subr.mxu0 0.0
  %269 = vmatpush1.xpose.msra.mxu0 %v222
  %270 = vmatprep.subr.mxu0 0.0
  %271 = vmatpush1.xpose.msra.mxu0 %v225
  %272 = vmatprep.subr.mxu0 0.0
  %273 = vmatpush1.xpose.msra.mxu0 %v228
  %274 = vmatprep.subr.mxu0 0.0
  %275 = vmatpush1.xpose.msra.mxu0 %v231
  %276 = vmatprep.subr.mxu0 0.0
  %277 = vmatpush1.xpose.msra.mxu0 %v234
  %278 = vmatprep.subr.mxu0 0.0
  %279 = vmatpush1.xpose.msra.mxu0 %v237
  %280 = vmatprep.subr.mxu0 0.0
  %281 = vmatpush1.xpose.msra.mxu0 %v240
  %282 = vmatprep.subr.mxu0 0.0
  %283 = vmatpush1.xpose.msra.mxu0 %v243
  %284 = vmatprep.subr.mxu0 0.0
  %285 = vmatpush1.xpose.msra.mxu0 %v246
  %286 = vmatprep.subr.mxu0 0.0
  %287 = vmatpush1.xpose.msra.mxu0 %v249
  %288 = vmatprep.subr.mxu0 0.0
  %289 = vmatpush1.xpose.msra.mxu0 %v252
  %290 = vmatprep.subr.mxu0 0.0
  %291 = vmatpush1.xpose.msra.mxu0 %v255
  %292 = vmatprep.subr.mxu0 0.0
  %293 = vmatpush1.xpose.msra.mxu0 %v258
  %294 = vmatprep.subr.mxu0 0.0
  %295 = vmatpush1.xpose.msra.mxu0 %v261
  %296 = vmatprep.subr.mxu0 0.0
  %297 = vmatpush1.xpose.msra.mxu0 %v264
  %298 = vmatprep.subr.mxu0 0.0
  %299 = vmatpush1.xpose.msra.mxu0 0.0
  %300 = vmatprep.subr.mxu0 0.0
  %301 = vmatpush1.xpose.msra.mxu0 0.0
  %302 = vmatprep.subr.mxu0 0.0
  %303 = vmatpush1.xpose.msra.mxu0 0.0
  %304 = vmatprep.subr.mxu0 0.0
  %305 = vmatpush1.xpose.msra.mxu0 0.0
  %306 = vmatprep.subr.mxu0 0.0
  %307 = vmatpush1.xpose.msra.mxu0 0.0
  %308 = vmatprep.subr.mxu0 0.0
  %309 = vmatpush1.xpose.msra.mxu0 0.0
  %310 = vmatprep.subr.mxu0 0.0
  %311 = vmatpush1.xpose.msra.mxu0 0.0
  %312 = vmatprep.subr.mxu0 0.0
  %313 = vmatpush1.xpose.msra.mxu0 0.0
  %314 = vmatprep.subr.mxu0 0.0
  %315 = vmatpush1.xpose.msra.mxu0 0.0
  %316 = vmatprep.subr.mxu0 0.0
  %317 = vmatpush1.xpose.msra.mxu0 0.0
  %318 = vmatprep.subr.mxu0 0.0
  %319 = vmatpush1.xpose.msra.mxu0 0.0
  %320 = vmatprep.subr.mxu0 0.0
  %321 = vmatpush1.xpose.msra.mxu0 0.0
  %322 = vmatprep.subr.mxu0 0.0
  %323 = vmatpush1.xpose.msra.mxu0 0.0
  %324 = vmatprep.subr.mxu0 0.0
  %325 = vmatpush1.xpose.msra.mxu0 0.0
  %326 = vmatprep.subr.mxu0 0.0
  %327 = vmatpush1.xpose.msra.mxu0 0.0
  %328 = vmatprep.subr.mxu0 0.0
  %329 = vmatpush1.xpose.msra.mxu0 0.0
  %330 = vmatprep.mubr.f32.mxu0 0.0
  %331 = vmatmul.mubr.f32.gmra.mrb[0].mxu0 %v216
  %v332 = vpop.f32.mrb[0].mxu0
  %v333 = vadd.f32 0.0, %v332
  %v334 = vpop.f32.mrb[0].mxu0
  %335 = vdwg.mxu0
  %v336 = vlaneseq
  %v337 = vshrl.u32 %v336, 7
  %v338 = vsub.s32 1, %v337
  %v339 = vrot.slane %v20, %v338
  %v340 = vmul.f32 %v37, %v339
  %v341 = vmul.f32 %v38, %v339
  %v342 = vmul.f32 %v39, %v339
  %v343 = vmul.f32 %v40, %v339
  %v344 = vmul.f32 %v41, %v339
  %v345 = vmul.f32 %v42, %v339
  %v346 = vmul.f32 %v43, %v339
  %v347 = vmul.f32 %v44, %v339
  %v348 = vmul.f32 %v45, %v339
  %v349 = vmul.f32 %v46, %v339
  %v350 = vmul.f32 %v47, %v339
  %v351 = vmul.f32 %v48, %v339
  %v352 = vmul.f32 %v49, %v339
  %v353 = vmul.f32 %v50, %v339
  %v354 = vmul.f32 %v51, %v339
  %v355 = vmul.f32 %v52, %v339
  %v356 = vsel %vm78, %v340, 0.0
  %357 = vadd.xlane.f32.xlu0 %v356
  %v358 = vpop.xlane.xlu0 %357
  %v359 = vsel %vm78, %v341, 0.0
  %360 = vadd.xlane.f32.xlu0 %v359
  %v361 = vpop.xlane.xlu0 %360
  %v362 = vsel %vm78, %v342, 0.0
  %363 = vadd.xlane.f32.xlu0 %v362
  %v364 = vpop.xlane.xlu0 %363
  %v365 = vsel %vm78, %v343, 0.0
  %366 = vadd.xlane.f32.xlu0 %v365
  %v367 = vpop.xlane.xlu0 %366
  %v368 = vsel %vm78, %v344, 0.0
  %369 = vadd.xlane.f32.xlu0 %v368
  %v370 = vpop.xlane.xlu0 %369
  %v371 = vsel %vm78, %v345, 0.0
  %372 = vadd.xlane.f32.xlu0 %v371
  %v373 = vpop.xlane.xlu0 %372
  %v374 = vsel %vm78, %v346, 0.0
  %375 = vadd.xlane.f32.xlu0 %v374
  %v376 = vpop.xlane.xlu0 %375
  %v377 = vsel %vm78, %v347, 0.0
  %378 = vadd.xlane.f32.xlu0 %v377
  %v379 = vpop.xlane.xlu0 %378
  %v380 = vsel %vm78, %v348, 0.0
  %381 = vadd.xlane.f32.xlu0 %v380
  %v382 = vpop.xlane.xlu0 %381
  %v383 = vsel %vm78, %v349, 0.0
  %384 = vadd.xlane.f32.xlu0 %v383
  %v385 = vpop.xlane.xlu0 %384
  %v386 = vsel %vm78, %v350, 0.0
  %387 = vadd.xlane.f32.xlu0 %v386
  %v388 = vpop.xlane.xlu0 %387
  %v389 = vsel %vm78, %v351, 0.0
  %390 = vadd.xlane.f32.xlu0 %v389
  %v391 = vpop.xlane.xlu0 %390
  %v392 = vsel %vm78, %v352, 0.0
  %393 = vadd.xlane.f32.xlu0 %v392
  %v394 = vpop.xlane.xlu0 %393
  %v395 = vsel %vm78, %v353, 0.0
  %396 = vadd.xlane.f32.xlu0 %v395
  %v397 = vpop.xlane.xlu0 %396
  %v398 = vsel %vm78, %v354, 0.0
  %399 = vadd.xlane.f32.xlu0 %v398
  %v400 = vpop.xlane.xlu0 %399
  %v401 = vsel %vm78, %v355, 0.0
  %402 = vadd.xlane.f32.xlu0 %v401
  %v403 = vpop.xlane.xlu0 %402
  %v404 = vlaneseq
  %v405 = vshrl.u32 %v404, 7
  %v406 = vsub.s32 0, %v405
  %v407 = vrot.slane %v333, %v406
  %v408 = vadd.f32 %v358, %v407
  %v409 = vadd.f32 %v361, %v407
  %v410 = vadd.f32 %v364, %v407
  %v411 = vadd.f32 %v367, %v407
  %v412 = vadd.f32 %v370, %v407
  %v413 = vadd.f32 %v373, %v407
  %v414 = vadd.f32 %v376, %v407
  %v415 = vadd.f32 %v379, %v407
  %v416 = vadd.f32 %v382, %v407
  %v417 = vadd.f32 %v385, %v407
  %v418 = vadd.f32 %v388, %v407
  %v419 = vadd.f32 %v391, %v407
  %v420 = vadd.f32 %v394, %v407
  %v421 = vadd.f32 %v397, %v407
  %v422 = vadd.f32 %v400, %v407
  %v423 = vadd.f32 %v403, %v407
  %vm424 = vcmp.gt.f32.partialorder %v408, 0.0
  %vm425 = vcmp.gt.f32.partialorder %v409, 0.0
  %vm426 = vcmp.gt.f32.partialorder %v410, 0.0
  %vm427 = vcmp.gt.f32.partialorder %v411, 0.0
  %vm428 = vcmp.gt.f32.partialorder %v412, 0.0
  %vm429 = vcmp.gt.f32.partialorder %v413, 0.0
  %vm430 = vcmp.gt.f32.partialorder %v414, 0.0
  %vm431 = vcmp.gt.f32.partialorder %v415, 0.0
  %vm432 = vcmp.gt.f32.partialorder %v416, 0.0
  %vm433 = vcmp.gt.f32.partialorder %v417, 0.0
  %vm434 = vcmp.gt.f32.partialorder %v418, 0.0
  %vm435 = vcmp.gt.f32.partialorder %v419, 0.0
  %vm436 = vcmp.gt.f32.partialorder %v420, 0.0
  %vm437 = vcmp.gt.f32.partialorder %v421, 0.0
  %vm438 = vcmp.gt.f32.partialorder %v422, 0.0
  %vm439 = vcmp.gt.f32.partialorder %v423, 0.0
  %v440 = vmul.f32 %v408, 0.2
  %v441 = vmul.f32 %v409, 0.2
  %v442 = vmul.f32 %v410, 0.2
  %v443 = vmul.f32 %v411, 0.2
  %v444 = vmul.f32 %v412, 0.2
  %v445 = vmul.f32 %v413, 0.2
  %v446 = vmul.f32 %v414, 0.2
  %v447 = vmul.f32 %v415, 0.2
  %v448 = vmul.f32 %v416, 0.2
  %v449 = vmul.f32 %v417, 0.2
  %v450 = vmul.f32 %v418, 0.2
  %v451 = vmul.f32 %v419, 0.2
  %v452 = vmul.f32 %v420, 0.2
  %v453 = vmul.f32 %v421, 0.2
  %v454 = vmul.f32 %v422, 0.2
  %v455 = vmul.f32 %v423, 0.2
  %v456 = vsel %vm424, %v408, %v440
  %v457 = vsel %vm425, %v409, %v441
  %v458 = vsel %vm426, %v410, %v442
  %v459 = vsel %vm427, %v411, %v443
  %v460 = vsel %vm428, %v412, %v444
  %v461 = vsel %vm429, %v413, %v445
  %v462 = vsel %vm430, %v414, %v446
  %v463 = vsel %vm431, %v415, %v447
  %v464 = vsel %vm432, %v416, %v448
  %v465 = vsel %vm433, %v417, %v449
  %v466 = vsel %vm434, %v418, %v450
  %v467 = vsel %vm435, %v419, %v451
  %v468 = vsel %vm436, %v420, %v452
  %v469 = vsel %vm437, %v421, %v453
  %v470 = vsel %vm438, %v422, %v454
  %v471 = vsel %vm439, %v423, %v455
  %v472 = vunpack.c.l.bf16 %v53
  %v473 = vunpack.c.l.bf16 %v54
  %v474 = vunpack.c.l.bf16 %v55
  %v475 = vunpack.c.l.bf16 %v56
  %v476 = vunpack.c.l.bf16 %v57
  %v477 = vunpack.c.l.bf16 %v58
  %v478 = vunpack.c.l.bf16 %v59
  %v479 = vunpack.c.l.bf16 %v60
  %v480 = vunpack.c.l.bf16 %v61
  %v481 = vunpack.c.l.bf16 %v62
  %v482 = vunpack.c.l.bf16 %v63
  %v483 = vunpack.c.l.bf16 %v64
  %v484 = vunpack.c.l.bf16 %v65
  %v485 = vunpack.c.l.bf16 %v66
  %v486 = vunpack.c.l.bf16 %v67
  %v487 = vunpack.c.l.bf16 %v68
  %v488 = vadd.f32 %v456, %v472
  %v489 = vadd.f32 %v457, %v473
  %v490 = vadd.f32 %v458, %v474
  %v491 = vadd.f32 %v459, %v475
  %v492 = vadd.f32 %v460, %v476
  %v493 = vadd.f32 %v461, %v477
  %v494 = vadd.f32 %v462, %v478
  %v495 = vadd.f32 %v463, %v479
  %v496 = vadd.f32 %v464, %v480
  %v497 = vadd.f32 %v465, %v481
  %v498 = vadd.f32 %v466, %v482
  %v499 = vadd.f32 %v467, %v483
  %v500 = vadd.f32 %v468, %v484
  %v501 = vadd.f32 %v469, %v485
  %v502 = vadd.f32 %v470, %v486
  %v503 = vadd.f32 %v471, %v487
  %504 = vmax.xlane.f32.xlu0 %v488
  %v505 = vpop.xlane.xlu0 %504
  %506 = vmax.xlane.f32.xlu0 %v489
  %v507 = vpop.xlane.xlu0 %506
  %508 = vmax.xlane.f32.xlu0 %v490
  %v509 = vpop.xlane.xlu0 %508
  %510 = vmax.xlane.f32.xlu0 %v491
  %v511 = vpop.xlane.xlu0 %510
  %512 = vmax.xlane.f32.xlu0 %v492
  %v513 = vpop.xlane.xlu0 %512
  %514 = vmax.xlane.f32.xlu0 %v493
  %v515 = vpop.xlane.xlu0 %514
  %516 = vmax.xlane.f32.xlu0 %v494
  %v517 = vpop.xlane.xlu0 %516
  %518 = vmax.xlane.f32.xlu0 %v495
  %v519 = vpop.xlane.xlu0 %518
  %520 = vmax.xlane.f32.xlu0 %v496
  %v521 = vpop.xlane.xlu0 %520
  %522 = vmax.xlane.f32.xlu0 %v497
  %v523 = vpop.xlane.xlu0 %522
  %524 = vmax.xlane.f32.xlu0 %v498
  %v525 = vpop.xlane.xlu0 %524
  %526 = vmax.xlane.f32.xlu0 %v499
  %v527 = vpop.xlane.xlu0 %526
  %528 = vmax.xlane.f32.xlu0 %v500
  %v529 = vpop.xlane.xlu0 %528
  %530 = vmax.xlane.f32.xlu0 %v501
  %v531 = vpop.xlane.xlu0 %530
  %532 = vmax.xlane.f32.xlu0 %v502
  %v533 = vpop.xlane.xlu0 %532
  %534 = vmax.xlane.f32.xlu0 %v503
  %v535 = vpop.xlane.xlu0 %534
  %v536 = vsub.f32 %v488, %v505
  %v537 = vsub.f32 %v489, %v507
  %v538 = vsub.f32 %v490, %v509
  %v539 = vsub.f32 %v491, %v511
  %v540 = vsub.f32 %v492, %v513
  %v541 = vsub.f32 %v493, %v515
  %v542 = vsub.f32 %v494, %v517
  %v543 = vsub.f32 %v495, %v519
  %v544 = vsub.f32 %v496, %v521
  %v545 = vsub.f32 %v497, %v523
  %v546 = vsub.f32 %v498, %v525
  %v547 = vsub.f32 %v499, %v527
  %v548 = vsub.f32 %v500, %v529
  %v549 = vsub.f32 %v501, %v531
  %v550 = vsub.f32 %v502, %v533
  %v551 = vsub.f32 %v503, %v535
  %v552 = vmul.f32 %v536, 1.442695
  %v553 = vpow.pop %v552
  %v554 = vmul.f32 %v537, 1.442695
  %v555 = vpow.pop %v554
  %v556 = vmul.f32 %v538, 1.442695
  %v557 = vpow.pop %v556
  %v558 = vmul.f32 %v539, 1.442695
  %v559 = vpow.pop %v558
  %v560 = vmul.f32 %v540, 1.442695
  %v561 = vpow.pop %v560
  %v562 = vmul.f32 %v541, 1.442695
  %v563 = vpow.pop %v562
  %v564 = vmul.f32 %v542, 1.442695
  %v565 = vpow.pop %v564
  %v566 = vmul.f32 %v543, 1.442695
  %v567 = vpow.pop %v566
  %v568 = vmul.f32 %v544, 1.442695
  %v569 = vpow.pop %v568
  %v570 = vmul.f32 %v545, 1.442695
  %v571 = vpow.pop %v570
  %v572 = vmul.f32 %v546, 1.442695
  %v573 = vpow.pop %v572
  %v574 = vmul.f32 %v547, 1.442695
  %v575 = vpow.pop %v574
  %v576 = vmul.f32 %v548, 1.442695
  %v577 = vpow.pop %v576
  %v578 = vmul.f32 %v549, 1.442695
  %v579 = vpow.pop %v578
  %v580 = vmul.f32 %v550, 1.442695
  %v581 = vpow.pop %v580
  %v582 = vmul.f32 %v551, 1.442695
  %v583 = vpow.pop %v582
  %v584 = vpack.c.bf16 %v555, %v553
  %v585 = vpack.c.bf16 %v559, %v557
  %v586 = vpack.c.bf16 %v563, %v561
  %v587 = vpack.c.bf16 %v567, %v565
  %v588 = vpack.c.bf16 %v571, %v569
  %v589 = vpack.c.bf16 %v575, %v573
  %v590 = vpack.c.bf16 %v579, %v577
  %v591 = vpack.c.bf16 %v583, %v581
  %592 = vmatprep.subr.bf16.mxu0 0
  %593 = vmatpush1.bf16.msra.mxu0 %v207
  %594 = vmatprep.subr.bf16.mxu0 0
  %595 = vmatpush1.bf16.msra.mxu0 %v208
  %596 = vmatprep.subr.bf16.mxu0 0
  %597 = vmatpush1.bf16.msra.mxu0 %v209
  %598 = vmatprep.subr.bf16.mxu0 0
  %599 = vmatpush1.bf16.msra.mxu0 %v210
  %600 = vmatprep.subr.bf16.mxu0 0
  %601 = vmatpush1.bf16.msra.mxu0 %v211
  %602 = vmatprep.subr.bf16.mxu0 0
  %603 = vmatpush1.bf16.msra.mxu0 %v212
  %604 = vmatprep.subr.bf16.mxu0 0
  %605 = vmatpush1.bf16.msra.mxu0 %v213
  %606 = vmatprep.subr.bf16.mxu0 0
  %607 = vmatpush1.bf16.msra.mxu0 %v214
  %608 = vmatprep.subr.bf16.mxu0 0
  %609 = vmatpush1.bf16.msra.mxu0 0
  %610 = vmatprep.subr.bf16.mxu0 0
  %611 = vmatpush1.bf16.msra.mxu0 0
  %612 = vmatprep.subr.bf16.mxu0 0
  %613 = vmatpush1.bf16.msra.mxu0 0
  %614 = vmatprep.subr.bf16.mxu0 0
  %615 = vmatpush1.bf16.msra.mxu0 0
  %616 = vmatprep.subr.bf16.mxu0 0
  %617 = vmatpush1.bf16.msra.mxu0 0
  %618 = vmatprep.subr.bf16.mxu0 0
  %619 = vmatpush1.bf16.msra.mxu0 0
  %620 = vmatprep.subr.bf16.mxu0 0
  %621 = vmatpush1.bf16.msra.mxu0 0
  %622 = vmatprep.subr.bf16.mxu0 0
  %623 = vmatpush1.bf16.msra.mxu0 0
  %624 = vmatprep.mubr.bf16.mxu0 0
  %625 = vmatmul.mubr.bf16.gmra.mrb[0].mxu0 %v584
  %v626 = vpop.f32.mrb[0].mxu0
  %v627 = vadd.f32 0.0, %v626
  %v628 = vpop.f32.mrb[0].mxu0
  %v629 = vpop.f32.mrb[0].mxu0
  %v630 = vadd.f32 0.0, %v629
  %v631 = vpop.f32.mrb[0].mxu0
  %632 = vmatprep.mubr.bf16.mxu0 0
  %633 = vmatmul.mubr.bf16.gmra.mrb[0].mxu0 %v585
  %v634 = vpop.f32.mrb[0].mxu0
  %v635 = vadd.f32 0.0, %v634
  %v636 = vpop.f32.mrb[0].mxu0
  %v637 = vpop.f32.mrb[0].mxu0
  %v638 = vadd.f32 0.0, %v637
  %v639 = vpop.f32.mrb[0].mxu0
  %640 = vmatprep.mubr.bf16.mxu0 0
  %641 = vmatmul.mubr.bf16.gmra.mrb[0].mxu0 %v586
  %v642 = vpop.f32.mrb[0].mxu0
  %v643 = vadd.f32 0.0, %v642
  %v644 = vpop.f32.mrb[0].mxu0
  %v645 = vpop.f32.mrb[0].mxu0
  %v646 = vadd.f32 0.0, %v645
  %v647 = vpop.f32.mrb[0].mxu0
  %648 = vmatprep.mubr.bf16.mxu0 0
  %649 = vmatmul.mubr.bf16.gmra.mrb[0].mxu0 %v587
  %v650 = vpop.f32.mrb[0].mxu0
  %v651 = vadd.f32 0.0, %v650
  %v652 = vpop.f32.mrb[0].mxu0
  %v653 = vpop.f32.mrb[0].mxu0
  %v654 = vadd.f32 0.0, %v653
  %v655 = vpop.f32.mrb[0].mxu0
  %656 = vmatprep.mubr.bf16.mxu0 0
  %657 = vmatmul.mubr.bf16.gmra.mrb[0].mxu0 %v588
  %v658 = vpop.f32.mrb[0].mxu0
  %v659 = vadd.f32 0.0, %v658
  %v660 = vpop.f32.mrb[0].mxu0
  %v661 = vpop.f32.mrb[0].mxu0
  %v662 = vadd.f32 0.0, %v661
  %v663 = vpop.f32.mrb[0].mxu0
  %664 = vmatprep.mubr.bf16.mxu0 0
  %665 = vmatmul.mubr.bf16.gmra.mrb[0].mxu0 %v589
  %v666 = vpop.f32.mrb[0].mxu0
  %v667 = vadd.f32 0.0, %v666
  %v668 = vpop.f32.mrb[0].mxu0
  %v669 = vpop.f32.mrb[0].mxu0
  %v670 = vadd.f32 0.0, %v669
  %v671 = vpop.f32.mrb[0].mxu0
  %672 = vmatprep.mubr.bf16.mxu0 0
  %673 = vmatmul.mubr.bf16.gmra.mrb[0].mxu0 %v590
  %v674 = vpop.f32.mrb[0].mxu0
  %v675 = vadd.f32 0.0, %v674
  %v676 = vpop.f32.mrb[0].mxu0
  %v677 = vpop.f32.mrb[0].mxu0
  %v678 = vadd.f32 0.0, %v677
  %v679 = vpop.f32.mrb[0].mxu0
  %680 = vmatprep.mubr.bf16.mxu0 0
  %681 = vmatmul.mubr.bf16.gmra.mrb[0].mxu0 %v591
  %v682 = vpop.f32.mrb[0].mxu0
  %v683 = vadd.f32 0.0, %v682
  %v684 = vpop.f32.mrb[0].mxu0
  %v685 = vpop.f32.mrb[0].mxu0
  %v686 = vadd.f32 0.0, %v685
  %v687 = vpop.f32.mrb[0].mxu0
  %688 = vdwg.mxu0
  %v689 = vrcp.pop %v627
  %v690 = vrcp.pop %v630
  %v691 = vrcp.pop %v635
  %v692 = vrcp.pop %v638
  %v693 = vrcp.pop %v643
  %v694 = vrcp.pop %v646
  %v695 = vrcp.pop %v651
  %v696 = vrcp.pop %v654
  %v697 = vrcp.pop %v659
  %v698 = vrcp.pop %v662
  %v699 = vrcp.pop %v667
  %v700 = vrcp.pop %v670
  %v701 = vrcp.pop %v675
  %v702 = vrcp.pop %v678
  %v703 = vrcp.pop %v683
  %v704 = vrcp.pop %v686
  %706 = vset.pattern.permute.xlu0 16
  %707 = vperm.xlu0 %706, %v689
  %v708 = vpop.permute.xlu0 %707
  %711 = vset.pattern.permute.xlu0 16
  %712 = vperm.xlu0 %711, %v690
  %v713 = vpop.permute.xlu0 %712
  %716 = vset.pattern.permute.xlu0 16
  %717 = vperm.xlu0 %716, %v691
  %v718 = vpop.permute.xlu0 %717
  %721 = vset.pattern.permute.xlu0 16
  %722 = vperm.xlu0 %721, %v692
  %v723 = vpop.permute.xlu0 %722
  %726 = vset.pattern.permute.xlu0 16
  %727 = vperm.xlu0 %726, %v693
  %v728 = vpop.permute.xlu0 %727
  %731 = vset.pattern.permute.xlu0 16
  %732 = vperm.xlu0 %731, %v694
  %v733 = vpop.permute.xlu0 %732
  %736 = vset.pattern.permute.xlu0 16
  %737 = vperm.xlu0 %736, %v695
  %v738 = vpop.permute.xlu0 %737
  %741 = vset.pattern.permute.xlu0 16
  %742 = vperm.xlu0 %741, %v696
  %v743 = vpop.permute.xlu0 %742
  %746 = vset.pattern.permute.xlu0 16
  %747 = vperm.xlu0 %746, %v697
  %v748 = vpop.permute.xlu0 %747
  %751 = vset.pattern.permute.xlu0 16
  %752 = vperm.xlu0 %751, %v698
  %v753 = vpop.permute.xlu0 %752
  %756 = vset.pattern.permute.xlu0 16
  %757 = vperm.xlu0 %756, %v699
  %v758 = vpop.permute.xlu0 %757
  %761 = vset.pattern.permute.xlu0 16
  %762 = vperm.xlu0 %761, %v700
  %v763 = vpop.permute.xlu0 %762
  %766 = vset.pattern.permute.xlu0 16
  %767 = vperm.xlu0 %766, %v701
  %v768 = vpop.permute.xlu0 %767
  %771 = vset.pattern.permute.xlu0 16
  %772 = vperm.xlu0 %771, %v702
  %v773 = vpop.permute.xlu0 %772
  %776 = vset.pattern.permute.xlu0 16
  %777 = vperm.xlu0 %776, %v703
  %v778 = vpop.permute.xlu0 %777
  %781 = vset.pattern.permute.xlu0 16
  %782 = vperm.xlu0 %781, %v704
  %v783 = vpop.permute.xlu0 %782
  %v785 = vmul.f32 %v627, %v708
  %v786 = vmul.f32 %v630, %v713
  %v787 = vmul.f32 %v635, %v718
  %v788 = vmul.f32 %v638, %v723
  %v789 = vmul.f32 %v643, %v728
  %v790 = vmul.f32 %v646, %v733
  %v791 = vmul.f32 %v651, %v738
  %v792 = vmul.f32 %v654, %v743
  %v793 = vmul.f32 %v659, %v748
  %v794 = vmul.f32 %v662, %v753
  %v795 = vmul.f32 %v667, %v758
  %v796 = vmul.f32 %v670, %v763
  %v797 = vmul.f32 %v675, %v768
  %v798 = vmul.f32 %v678, %v773
  %v799 = vmul.f32 %v683, %v778
  %v800 = vmul.f32 %v686, %v783
  %v801 = vlaneseq
  %v802 = vshrl.u32 %v801, 7
  %v803 = vsub.s32 2, %v802
  %v804 = vrot.slane %v20, %v803
  %v805 = vadd.f32 %v785, %v804
  %v806 = vadd.f32 %v786, %v804
  %v807 = vadd.f32 %v787, %v804
  %v808 = vadd.f32 %v788, %v804
  %v809 = vadd.f32 %v789, %v804
  %v810 = vadd.f32 %v790, %v804
  %v811 = vadd.f32 %v791, %v804
  %v812 = vadd.f32 %v792, %v804
  %v813 = vadd.f32 %v793, %v804
  %v814 = vadd.f32 %v794, %v804
  %v815 = vadd.f32 %v795, %v804
  %v816 = vadd.f32 %v796, %v804
  %v817 = vadd.f32 %v797, %v804
  %v818 = vadd.f32 %v798, %v804
  %v819 = vadd.f32 %v799, %v804
  %v820 = vadd.f32 %v800, %v804
  %v821 = vmax.f32 %v805, 0.0
  %v822 = vmax.f32 %v806, 0.0
  %v823 = vmax.f32 %v807, 0.0
  %v824 = vmax.f32 %v808, 0.0
  %v825 = vmax.f32 %v809, 0.0
  %v826 = vmax.f32 %v810, 0.0
  %v827 = vmax.f32 %v811, 0.0
  %v828 = vmax.f32 %v812, 0.0
  %v829 = vmax.f32 %v813, 0.0
  %v830 = vmax.f32 %v814, 0.0
  %v831 = vmax.f32 %v815, 0.0
  %v832 = vmax.f32 %v816, 0.0
  %v833 = vmax.f32 %v817, 0.0
  %v834 = vmax.f32 %v818, 0.0
  %v835 = vmax.f32 %v819, 0.0
  %v836 = vmax.f32 %v820, 0.0
  %vm837 = vcmask 130048
  %838 = vst.msk [vmem:[%s4] sm:$0xff] %vm837, %v821
  %839 = vst.msk [vmem:[%s4 + $0x8] sm:$0xff] %vm837, %v822
  %840 = vst.msk [vmem:[%s4 + $0x10] sm:$0xff] %vm837, %v823
  %841 = vst.msk [vmem:[%s4 + $0x18] sm:$0xff] %vm837, %v824
  %842 = vst.msk [vmem:[%s4 + $0x20] sm:$0xff] %vm837, %v825
  %843 = vst.msk [vmem:[%s4 + $0x28] sm:$0xff] %vm837, %v826
  %844 = vst.msk [vmem:[%s4 + $0x30] sm:$0xff] %vm837, %v827
  %845 = vst.msk [vmem:[%s4 + $0x38] sm:$0xff] %vm837, %v828
  %846 = vst.msk [vmem:[%s4 + $0x40] sm:$0xff] %vm837, %v829
  %847 = vst.msk [vmem:[%s4 + $0x48] sm:$0xff] %vm837, %v830
  %848 = vst.msk [vmem:[%s4 + $0x50] sm:$0xff] %vm837, %v831
  %849 = vst.msk [vmem:[%s4 + $0x58] sm:$0xff] %vm837, %v832
  %850 = vst.msk [vmem:[%s4 + $0x60] sm:$0xff] %vm837, %v833
  %851 = vst.msk [vmem:[%s4 + $0x68] sm:$0xff] %vm837, %v834
  %852 = vst.msk [vmem:[%s4 + $0x70] sm:$0xff] %vm837, %v835
  %853 = vst.msk [vmem:[%s4 + $0x78] sm:$0xff] %vm837, %v836
  // Predicated region
  $region18: #{tpu_custom_call.1} parent=0 // pred_check
    _
  $region19: #{tpu_custom_call.1} parent=0 // pred_check_branch
    %855 = sbr.rel (0) target = $region21
  $region20: #{tpu_custom_call.1} parent=0 // pred_region
    _
  $region21: #{tpu_custom_call.1} parent=0 // pred_fallthru
    _
  // Predicated region
  $region22: #{tpu_custom_call.1} parent=0 // pred_check
    _
  $region23: #{tpu_custom_call.1} parent=0 // pred_check_branch
    %857 = sbr.rel (0) target = $region25
  $region24: #{tpu_custom_call.1} parent=0 // pred_region
    _
  $region25: #{tpu_custom_call.1} parent=0 // pred_fallthru
    _

</llo_original>
